<compile_context>
chip_gen: v7x
topology: tpu7x:2x2x1
jax: 0.10.0
libtpu: 0.0.40
codegen_flags: <defaults>
</compile_context>

<pallas_src>
import functools

import jax
import jax.numpy as jnp
import numpy as np
from jax.experimental import pallas as pl
from jax.experimental.pallas import tpu as pltpu

KSIZE = 3
DILATION = 2
PAD = (KSIZE - 1) // 2 + 1  # = 2, matches the PyTorch module


def _dilated_conv_cat_kernel(xs_ref, m_ref, w_ref, b_ref, o_ref, *, width):
    """One (batch, H-strip) tile per grid step.

    xs_ref : (1, 1, C, Ls)  flat input strip: rows [t*Ht-PAD, t*Ht+Ht+PAD) of
                            the H-zero-padded image, flattened over (h, w),
                            with DILATION zeros of flat margin at each end.
    m_ref  : (2, Lo)        column-validity masks (row 0: kw=0, row 1: kw=2)
    w_ref  : (9, G, C)      conv weight, tap-major (kh*3+kw, g, c)
    b_ref  : (G, 1)         bias column
    o_ref  : (1, C+G, Lo)   fused output rows: [:C] = x, [C:] = relu(conv + b)
    """
    G = w_ref.shape[1]
    Lo = o_ref.shape[-1]                     # Ht * W (lane-dense output width)

    # Accumulator initialised with the bias (folds the bias add away).
    acc = jnp.broadcast_to(b_ref[...].astype(jnp.float32), (G, Lo))

    # 9 dilated taps = contiguous lane-shifted slices of the flat strip; each
    # feeds an accumulating MXU matmul.  No im2col patch, no transpose.
    for kh in range(KSIZE):
        for kw in range(KSIZE):
            off = kh * DILATION * width + kw * DILATION
            tap = xs_ref[0, 0, :, off:off + Lo]              # (C, Lo)
            if kw == 0:                                      # left-wrapped cols
                tap = tap * m_ref[0:1, :]
            elif kw == KSIZE - 1:                            # right-wrapped cols
                tap = tap * m_ref[1:2, :]
            acc = acc + jnp.dot(w_ref[kh * KSIZE + kw], tap,
                                preferred_element_type=jnp.float32)

    new_rows = jnp.maximum(acc, 0.0).astype(o_ref.dtype)     # (G, Lo)

    # Identity rows of the concat: the centre tap (kh=kw=1) of the dilated
    # window is exactly the un-padded x for this strip and is already resident
    # in VMEM - no extra HBM stream needed.
    centre = DILATION * width + DILATION
    x_rows = xs_ref[0, 0, :, centre:centre + Lo].astype(o_ref.dtype)

    # Single full (unmasked) store of the whole (C+G, Lo) block.
    o_ref[0] = jnp.concatenate([x_rows, new_rows], axis=0)


def _pick_row_tile(H, W, C, itemsize, budget_bytes=4 << 20):
    """Largest divisor Ht of H whose halo'd input strip fits the per-buffer
    VMEM budget.  Sub-image tiles must keep Ht*W a multiple of 128 so the
    output blocks stay lane-aligned (the full image is always allowed)."""
    def strip_bytes(ht):
        return C * ((ht + 2 * PAD) * W + 2 * DILATION) * itemsize

    cands = [d for d in range(1, H + 1)
             if H % d == 0 and (d == H or (d * W) % 128 == 0)]
    fitting = [d for d in cands if strip_bytes(d) <= budget_bytes]
    return max(fitting) if fitting else min(cands)


@jax.jit
def make_dilation_dense_forward(x, weight, bias):
    """x: (N, C, H, W); weight: (G, C, 3, 3) [PyTorch OIHW]; bias: (G,)."""
    N, C, H, W = x.shape
    G = weight.shape[0]

    Ht = _pick_row_tile(H, W, C, x.dtype.itemsize)
    HT = H // Ht
    Lo = Ht * W                                   # output lanes per grid step
    Ls = (Ht + 2 * PAD) * W + 2 * DILATION        # halo'd flat strip length

    # ---- input-side glue (small, C channels only; no NHWC transpose) ----
    # zero-pad H, flatten (h, w) onto one lane-dense axis, add a DILATION-wide
    # flat margin, then cut overlapping strips with a 2*PAD-row halo.
    xf = jnp.pad(x, ((0, 0), (0, 0), (PAD, PAD), (0, 0)))
    xf = xf.reshape(N, C, (H + 2 * PAD) * W)
    xf = jnp.pad(xf, ((0, 0), (0, 0), (DILATION, DILATION)))
    if HT == 1:
        strips = xf[:, None, :, :]                               # (N, 1, C, Ls)
    else:
        strips = jnp.stack(
            [xf[:, :, t * Ht * W: t * Ht * W + Ls] for t in range(HT)], axis=1)

    # Column-validity masks for the kw=0 / kw=2 taps (the flat shift wraps
    # across W-rows at the image border); compile-time constants.
    col = np.arange(Lo) % W
    kw_masks = jnp.asarray(
        np.stack([col >= DILATION, col < W - DILATION]).astype(np.float32),
        dtype=x.dtype)                                           # (2, Lo)

    # (G, C, kh, kw) -> (kh*3+kw, G, C): tap-major weights for the 9 matmuls.
    w_packed = jnp.transpose(weight, (2, 3, 0, 1)).reshape(KSIZE * KSIZE, G, C)
    b_col = bias.reshape(G, 1)

    kernel = functools.partial(_dilated_conv_cat_kernel, width=W)
    out_flat = pl.pallas_call(
        kernel,
        out_shape=jax.ShapeDtypeStruct((N, C + G, H * W), x.dtype),
        grid_spec=pltpu.PrefetchScalarGridSpec(
            num_scalar_prefetch=0,
            grid=(N, HT),
            in_specs=[
                pl.BlockSpec((1, 1, C, Ls), lambda n, t: (n, t, 0, 0)),
                pl.BlockSpec((2, Lo), lambda n, t: (0, 0)),
                pl.BlockSpec((KSIZE * KSIZE, G, C), lambda n, t: (0, 0, 0)),
                pl.BlockSpec((G, 1), lambda n, t: (0, 0)),
            ],
            out_specs=pl.BlockSpec((1, C + G, Lo), lambda n, t: (n, 0, t)),
        ),
        compiler_params=pltpu.CompilerParams(
            dimension_semantics=("parallel", "parallel")),
    )(strips, kw_masks, w_packed, b_col)                         # (N, C+G, H*W)

    # Free reshape: rows are already NCHW-ordered and lane-dense.
    return out_flat.reshape(N, C + G, H, W)


def _reference_forward(x_nchw, weight, bias):
    """Pure-JAX reference (lax conv) for a correctness cross-check."""
    conv = jax.lax.conv_general_dilated(
        x_nchw, weight,
        window_strides=(1, 1),
        padding=((PAD, PAD), (PAD, PAD)),
        rhs_dilation=(DILATION, DILATION),
        dimension_numbers=("NCHW", "OIHW", "NCHW"),
    ) + bias.reshape(1, -1, 1, 1)
    return jnp.concatenate([x_nchw, jax.nn.relu(conv)], axis=1)


if __name__ == "__main__":
    # Small deterministic example: nChannels=4, growthRate=8, 16x16 spatial.
    N, C, G, H, W = 2, 4, 8, 16, 16
    key = jax.random.PRNGKey(0)
    kx, kw, kb = jax.random.split(key, 3)

    x = jax.random.normal(kx, (N, C, H, W), dtype=jnp.float32)
    weight = jax.random.normal(kw, (G, C, KSIZE, KSIZE), dtype=jnp.float32) * 0.1
    bias = jax.random.normal(kb, (G,), dtype=jnp.float32) * 0.1

    out = make_dilation_dense_forward(x, weight, bias)
    out = jax.block_until_ready(out)

    ref = jax.block_until_ready(_reference_forward(x, weight, bias))
    assert out.shape == (N, C + G, H, W), out.shape
    assert jnp.allclose(out, ref, atol=1e-4, rtol=1e-4), "mismatch vs reference"

    print("KERNEL_OK")
</pallas_src>

<mosaic_0001>
module attributes {stable_mosaic.version = 11 : i64} {
  func.func @_dilated_conv_cat_kernel(%arg0: i32, %arg1: i32, %arg2: memref<1x1x4x324xf32, #tpu.memory_space<vmem>>, %arg3: memref<2x256xf32, #tpu.memory_space<vmem>>, %arg4: memref<9x8x4xf32, #tpu.memory_space<vmem>>, %arg5: memref<8x1xf32, #tpu.memory_space<vmem>>, %arg6: memref<1x12x256xf32, #tpu.memory_space<vmem>>) attributes {dimension_semantics = [#tpu.dimension_semantics<parallel>, #tpu.dimension_semantics<parallel>], iteration_bounds = array<i64: 2, 1>, scalar_prefetch = 0 : i64, scratch_operands = 0 : i64, tpu.core_type = #tpu.core_type<tc>, window_params = [{transform_indices = @transform_0, window_bounds = array<i64: 1, 1, 4, 324>}, {pipeline_mode = #tpu.pipeline_mode<synchronous>, transform_indices = @transform_1, window_bounds = array<i64: 2, 256>}, {pipeline_mode = #tpu.pipeline_mode<synchronous>, transform_indices = @transform_2, window_bounds = array<i64: 9, 8, 4>}, {pipeline_mode = #tpu.pipeline_mode<synchronous>, transform_indices = @transform_3, window_bounds = array<i64: 8, 1>}, {transform_indices = @transform_4, window_bounds = array<i64: 1, 12, 256>}]} {
    %c0 = arith.constant 0 : index
    %c0_0 = arith.constant 0 : index
    %0 = vector.load %arg5[%c0, %c0_0] : memref<8x1xf32, #tpu.memory_space<vmem>>, vector<8x1xf32>
    %1 = vector.shape_cast %0 : vector<8x1xf32> to vector<8x1xf32>
    %2 = vector.broadcast %1 : vector<8x1xf32> to vector<8x256xf32>
    %c0_1 = arith.constant 0 : index
    %c0_2 = arith.constant 0 : index
    %c0_3 = arith.constant 0 : index
    %c0_4 = arith.constant 0 : index
    %3 = vector.load %arg2[%c0_1, %c0_2, %c0_3, %c0_4] : memref<1x1x4x324xf32, #tpu.memory_space<vmem>>, vector<1x1x4x256xf32>
    %4 = vector.shape_cast %3 : vector<1x1x4x256xf32> to vector<4x256xf32>
    %c0_5 = arith.constant 0 : index
    %c0_6 = arith.constant 0 : index
    %5 = vector.load %arg3[%c0_5, %c0_6] : memref<2x256xf32, #tpu.memory_space<vmem>>, vector<1x256xf32>
    %6 = vector.broadcast %5 : vector<1x256xf32> to vector<4x256xf32>
    %7 = arith.mulf %4, %6 : vector<4x256xf32>
    %c0_7 = arith.constant 0 : index
    %c0_8 = arith.constant 0 : index
    %c0_9 = arith.constant 0 : index
    %8 = vector.load %arg4[%c0_7, %c0_8, %c0_9] : memref<9x8x4xf32, #tpu.memory_space<vmem>>, vector<1x8x4xf32>
    %9 = vector.shape_cast %8 : vector<1x8x4xf32> to vector<8x4xf32>
    %cst = arith.constant dense<0.000000e+00> : vector<8x256xf32>
    %10 = tpu.matmul %9, %7, %cst {dimension_numbers = #tpu.dot_dimension_numbers<[1], [0], [0], [1], [0, 0, 1, 1], [], []>} : vector<8x4xf32>, vector<4x256xf32>, vector<8x256xf32> -> vector<8x256xf32>
    %11 = arith.addf %2, %10 : vector<8x256xf32>
    %c0_10 = arith.constant 0 : index
    %c0_11 = arith.constant 0 : index
    %c0_12 = arith.constant 0 : index
    %c2 = arith.constant 2 : index
    %12 = vector.load %arg2[%c0_10, %c0_11, %c0_12, %c2] : memref<1x1x4x324xf32, #tpu.memory_space<vmem>>, vector<1x1x4x256xf32>
    %13 = vector.shape_cast %12 : vector<1x1x4x256xf32> to vector<4x256xf32>
    %c1 = arith.constant 1 : index
    %c0_13 = arith.constant 0 : index
    %c0_14 = arith.constant 0 : index
    %14 = vector.load %arg4[%c1, %c0_13, %c0_14] : memref<9x8x4xf32, #tpu.memory_space<vmem>>, vector<1x8x4xf32>
    %15 = vector.shape_cast %14 : vector<1x8x4xf32> to vector<8x4xf32>
    %cst_15 = arith.constant dense<0.000000e+00> : vector<8x256xf32>
    %16 = tpu.matmul %15, %13, %cst_15 {dimension_numbers = #tpu.dot_dimension_numbers<[1], [0], [0], [1], [0, 0, 1, 1], [], []>} : vector<8x4xf32>, vector<4x256xf32>, vector<8x256xf32> -> vector<8x256xf32>
    %17 = arith.addf %11, %16 : vector<8x256xf32>
    %c0_16 = arith.constant 0 : index
    %c0_17 = arith.constant 0 : index
    %c0_18 = arith.constant 0 : index
    %c4 = arith.constant 4 : index
    %18 = vector.load %arg2[%c0_16, %c0_17, %c0_18, %c4] : memref<1x1x4x324xf32, #tpu.memory_space<vmem>>, vector<1x1x4x256xf32>
    %19 = vector.shape_cast %18 : vector<1x1x4x256xf32> to vector<4x256xf32>
    %c1_19 = arith.constant 1 : index
    %c0_20 = arith.constant 0 : index
    %20 = vector.load %arg3[%c1_19, %c0_20] : memref<2x256xf32, #tpu.memory_space<vmem>>, vector<1x256xf32>
    %21 = vector.broadcast %20 : vector<1x256xf32> to vector<4x256xf32>
    %22 = arith.mulf %19, %21 : vector<4x256xf32>
    %c2_21 = arith.constant 2 : index
    %c0_22 = arith.constant 0 : index
    %c0_23 = arith.constant 0 : index
    %23 = vector.load %arg4[%c2_21, %c0_22, %c0_23] : memref<9x8x4xf32, #tpu.memory_space<vmem>>, vector<1x8x4xf32>
    %24 = vector.shape_cast %23 : vector<1x8x4xf32> to vector<8x4xf32>
    %cst_24 = arith.constant dense<0.000000e+00> : vector<8x256xf32>
    %25 = tpu.matmul %24, %22, %cst_24 {dimension_numbers = #tpu.dot_dimension_numbers<[1], [0], [0], [1], [0, 0, 1, 1], [], []>} : vector<8x4xf32>, vector<4x256xf32>, vector<8x256xf32> -> vector<8x256xf32>
    %26 = arith.addf %17, %25 : vector<8x256xf32>
    %c0_25 = arith.constant 0 : index
    %c0_26 = arith.constant 0 : index
    %c0_27 = arith.constant 0 : index
    %c32 = arith.constant 32 : index
    %27 = vector.load %arg2[%c0_25, %c0_26, %c0_27, %c32] : memref<1x1x4x324xf32, #tpu.memory_space<vmem>>, vector<1x1x4x256xf32>
    %28 = vector.shape_cast %27 : vector<1x1x4x256xf32> to vector<4x256xf32>
    %c0_28 = arith.constant 0 : index
    %c0_29 = arith.constant 0 : index
    %29 = vector.load %arg3[%c0_28, %c0_29] : memref<2x256xf32, #tpu.memory_space<vmem>>, vector<1x256xf32>
    %30 = vector.broadcast %29 : vector<1x256xf32> to vector<4x256xf32>
    %31 = arith.mulf %28, %30 : vector<4x256xf32>
    %c3 = arith.constant 3 : index
    %c0_30 = arith.constant 0 : index
    %c0_31 = arith.constant 0 : index
    %32 = vector.load %arg4[%c3, %c0_30, %c0_31] : memref<9x8x4xf32, #tpu.memory_space<vmem>>, vector<1x8x4xf32>
    %33 = vector.shape_cast %32 : vector<1x8x4xf32> to vector<8x4xf32>
    %cst_32 = arith.constant dense<0.000000e+00> : vector<8x256xf32>
    %34 = tpu.matmul %33, %31, %cst_32 {dimension_numbers = #tpu.dot_dimension_numbers<[1], [0], [0], [1], [0, 0, 1, 1], [], []>} : vector<8x4xf32>, vector<4x256xf32>, vector<8x256xf32> -> vector<8x256xf32>
    %35 = arith.addf %26, %34 : vector<8x256xf32>
    %c0_33 = arith.constant 0 : index
    %c0_34 = arith.constant 0 : index
    %c0_35 = arith.constant 0 : index
    %c34 = arith.constant 34 : index
    %36 = vector.load %arg2[%c0_33, %c0_34, %c0_35, %c34] : memref<1x1x4x324xf32, #tpu.memory_space<vmem>>, vector<1x1x4x256xf32>
    %37 = vector.shape_cast %36 : vector<1x1x4x256xf32> to vector<4x256xf32>
    %c4_36 = arith.constant 4 : index
    %c0_37 = arith.constant 0 : index
    %c0_38 = arith.constant 0 : index
    %38 = vector.load %arg4[%c4_36, %c0_37, %c0_38] : memref<9x8x4xf32, #tpu.memory_space<vmem>>, vector<1x8x4xf32>
    %39 = vector.shape_cast %38 : vector<1x8x4xf32> to vector<8x4xf32>
    %cst_39 = arith.constant dense<0.000000e+00> : vector<8x256xf32>
    %40 = tpu.matmul %39, %37, %cst_39 {dimension_numbers = #tpu.dot_dimension_numbers<[1], [0], [0], [1], [0, 0, 1, 1], [], []>} : vector<8x4xf32>, vector<4x256xf32>, vector<8x256xf32> -> vector<8x256xf32>
    %41 = arith.addf %35, %40 : vector<8x256xf32>
    %c0_40 = arith.constant 0 : index
    %c0_41 = arith.constant 0 : index
    %c0_42 = arith.constant 0 : index
    %c36 = arith.constant 36 : index
    %42 = vector.load %arg2[%c0_40, %c0_41, %c0_42, %c36] : memref<1x1x4x324xf32, #tpu.memory_space<vmem>>, vector<1x1x4x256xf32>
    %43 = vector.shape_cast %42 : vector<1x1x4x256xf32> to vector<4x256xf32>
    %c1_43 = arith.constant 1 : index
    %c0_44 = arith.constant 0 : index
    %44 = vector.load %arg3[%c1_43, %c0_44] : memref<2x256xf32, #tpu.memory_space<vmem>>, vector<1x256xf32>
    %45 = vector.broadcast %44 : vector<1x256xf32> to vector<4x256xf32>
    %46 = arith.mulf %43, %45 : vector<4x256xf32>
    %c5 = arith.constant 5 : index
    %c0_45 = arith.constant 0 : index
    %c0_46 = arith.constant 0 : index
    %47 = vector.load %arg4[%c5, %c0_45, %c0_46] : memref<9x8x4xf32, #tpu.memory_space<vmem>>, vector<1x8x4xf32>
    %48 = vector.shape_cast %47 : vector<1x8x4xf32> to vector<8x4xf32>
    %cst_47 = arith.constant dense<0.000000e+00> : vector<8x256xf32>
    %49 = tpu.matmul %48, %46, %cst_47 {dimension_numbers = #tpu.dot_dimension_numbers<[1], [0], [0], [1], [0, 0, 1, 1], [], []>} : vector<8x4xf32>, vector<4x256xf32>, vector<8x256xf32> -> vector<8x256xf32>
    %50 = arith.addf %41, %49 : vector<8x256xf32>
    %c0_48 = arith.constant 0 : index
    %c0_49 = arith.constant 0 : index
    %c0_50 = arith.constant 0 : index
    %c64 = arith.constant 64 : index
    %51 = vector.load %arg2[%c0_48, %c0_49, %c0_50, %c64] : memref<1x1x4x324xf32, #tpu.memory_space<vmem>>, vector<1x1x4x256xf32>
    %52 = vector.shape_cast %51 : vector<1x1x4x256xf32> to vector<4x256xf32>
    %c0_51 = arith.constant 0 : index
    %c0_52 = arith.constant 0 : index
    %53 = vector.load %arg3[%c0_51, %c0_52] : memref<2x256xf32, #tpu.memory_space<vmem>>, vector<1x256xf32>
    %54 = vector.broadcast %53 : vector<1x256xf32> to vector<4x256xf32>
    %55 = arith.mulf %52, %54 : vector<4x256xf32>
    %c6 = arith.constant 6 : index
    %c0_53 = arith.constant 0 : index
    %c0_54 = arith.constant 0 : index
    %56 = vector.load %arg4[%c6, %c0_53, %c0_54] : memref<9x8x4xf32, #tpu.memory_space<vmem>>, vector<1x8x4xf32>
    %57 = vector.shape_cast %56 : vector<1x8x4xf32> to vector<8x4xf32>
    %cst_55 = arith.constant dense<0.000000e+00> : vector<8x256xf32>
    %58 = tpu.matmul %57, %55, %cst_55 {dimension_numbers = #tpu.dot_dimension_numbers<[1], [0], [0], [1], [0, 0, 1, 1], [], []>} : vector<8x4xf32>, vector<4x256xf32>, vector<8x256xf32> -> vector<8x256xf32>
    %59 = arith.addf %50, %58 : vector<8x256xf32>
    %c0_56 = arith.constant 0 : index
    %c0_57 = arith.constant 0 : index
    %c0_58 = arith.constant 0 : index
    %c66 = arith.constant 66 : index
    %60 = vector.load %arg2[%c0_56, %c0_57, %c0_58, %c66] : memref<1x1x4x324xf32, #tpu.memory_space<vmem>>, vector<1x1x4x256xf32>
    %61 = vector.shape_cast %60 : vector<1x1x4x256xf32> to vector<4x256xf32>
    %c7 = arith.constant 7 : index
    %c0_59 = arith.constant 0 : index
    %c0_60 = arith.constant 0 : index
    %62 = vector.load %arg4[%c7, %c0_59, %c0_60] : memref<9x8x4xf32, #tpu.memory_space<vmem>>, vector<1x8x4xf32>
    %63 = vector.shape_cast %62 : vector<1x8x4xf32> to vector<8x4xf32>
    %cst_61 = arith.constant dense<0.000000e+00> : vector<8x256xf32>
    %64 = tpu.matmul %63, %61, %cst_61 {dimension_numbers = #tpu.dot_dimension_numbers<[1], [0], [0], [1], [0, 0, 1, 1], [], []>} : vector<8x4xf32>, vector<4x256xf32>, vector<8x256xf32> -> vector<8x256xf32>
    %65 = arith.addf %59, %64 : vector<8x256xf32>
    %c0_62 = arith.constant 0 : index
    %c0_63 = arith.constant 0 : index
    %c0_64 = arith.constant 0 : index
    %c68 = arith.constant 68 : index
    %66 = vector.load %arg2[%c0_62, %c0_63, %c0_64, %c68] : memref<1x1x4x324xf32, #tpu.memory_space<vmem>>, vector<1x1x4x256xf32>
    %67 = vector.shape_cast %66 : vector<1x1x4x256xf32> to vector<4x256xf32>
    %c1_65 = arith.constant 1 : index
    %c0_66 = arith.constant 0 : index
    %68 = vector.load %arg3[%c1_65, %c0_66] : memref<2x256xf32, #tpu.memory_space<vmem>>, vector<1x256xf32>
    %69 = vector.broadcast %68 : vector<1x256xf32> to vector<4x256xf32>
    %70 = arith.mulf %67, %69 : vector<4x256xf32>
    %c8 = arith.constant 8 : index
    %c0_67 = arith.constant 0 : index
    %c0_68 = arith.constant 0 : index
    %71 = vector.load %arg4[%c8, %c0_67, %c0_68] : memref<9x8x4xf32, #tpu.memory_space<vmem>>, vector<1x8x4xf32>
    %72 = vector.shape_cast %71 : vector<1x8x4xf32> to vector<8x4xf32>
    %cst_69 = arith.constant dense<0.000000e+00> : vector<8x256xf32>
    %73 = tpu.matmul %72, %70, %cst_69 {dimension_numbers = #tpu.dot_dimension_numbers<[1], [0], [0], [1], [0, 0, 1, 1], [], []>} : vector<8x4xf32>, vector<4x256xf32>, vector<8x256xf32> -> vector<8x256xf32>
    %74 = arith.addf %65, %73 : vector<8x256xf32>
    %cst_70 = arith.constant 0.000000e+00 : f32
    %75 = vector.broadcast %cst_70 : f32 to vector<8x256xf32>
    %76 = arith.maximumf %74, %75 : vector<8x256xf32>
    %c0_71 = arith.constant 0 : index
    %c0_72 = arith.constant 0 : index
    %c0_73 = arith.constant 0 : index
    %c34_74 = arith.constant 34 : index
    %77 = vector.load %arg2[%c0_71, %c0_72, %c0_73, %c34_74] : memref<1x1x4x324xf32, #tpu.memory_space<vmem>>, vector<1x1x4x256xf32>
    %78 = vector.shape_cast %77 : vector<1x1x4x256xf32> to vector<4x256xf32>
    %79 = tpu.concatenate %78, %76 in 0 : vector<4x256xf32>, vector<8x256xf32> -> vector<12x256xf32>
    %c0_75 = arith.constant 0 : index
    %c0_76 = arith.constant 0 : index
    %c0_77 = arith.constant 0 : index
    %80 = vector.load %arg6[%c0_75, %c0_76, %c0_77] : memref<1x12x256xf32, #tpu.memory_space<vmem>>, vector<1x12x256xf32>
    %81 = vector.shape_cast %80 : vector<1x12x256xf32> to vector<12x256xf32>
    %82 = vector.shape_cast %79 : vector<12x256xf32> to vector<1x12x256xf32>
    tpu.vector_store %arg6[%c0_75, %c0_76, %c0_77], %82 {strides = array<i32>} : memref<1x12x256xf32, #tpu.memory_space<vmem>>, vector<1x12x256xf32>,
    return
  }
  func.func @transform_0(%arg0: i32, %arg1: i32) -> (i32, i32, i32, i32) {
    %c0_i32 = arith.constant 0 : i32
    %c0_i32_0 = arith.constant 0 : i32
    %c0_i32_1 = arith.constant 0 : i32
    return %arg0, %arg1, %c0_i32, %c0_i32_0 : i32, i32, i32, i32
  }
  func.func @transform_1(%arg0: i32, %arg1: i32) -> (i32, i32) {
    %c0_i32 = arith.constant 0 : i32
    %c0_i32_0 = arith.constant 0 : i32
    %c0_i32_1 = arith.constant 0 : i32
    return %c0_i32, %c0_i32_0 : i32, i32
  }
  func.func @transform_2(%arg0: i32, %arg1: i32) -> (i32, i32, i32) {
    %c0_i32 = arith.constant 0 : i32
    %c0_i32_0 = arith.constant 0 : i32
    %c0_i32_1 = arith.constant 0 : i32
    %c0_i32_2 = arith.constant 0 : i32
    return %c0_i32, %c0_i32_0, %c0_i32_1 : i32, i32, i32
  }
  func.func @transform_3(%arg0: i32, %arg1: i32) -> (i32, i32) {
    %c0_i32 = arith.constant 0 : i32
    %c0_i32_0 = arith.constant 0 : i32
    %c0_i32_1 = arith.constant 0 : i32
    return %c0_i32, %c0_i32_0 : i32, i32
  }
  func.func @transform_4(%arg0: i32, %arg1: i32) -> (i32, i32, i32) {
    %c0_i32 = arith.constant 0 : i32
    %c0_i32_0 = arith.constant 0 : i32
    return %arg0, %c0_i32, %arg1 : i32, i32, i32
  }
}

</mosaic_0001>

<llo_original>
// kernel: make_dilation_dense_forward.1
$region0: #{make_dilation_dense_forward.1}
  #allocation0 [shape = 'u32[]', space=smem, size = 0x4, offset = 0x4, fixed_abs, tag = 'smem constant byte address 0x4 - core index']
  #allocation1 [shape = 'u32[144,128]{1,0:T(1,128)}', space=vmem, size = 0x12000, scoped, tag = 'internal scratch']
  %s0 = inlined_call_operand.vmem [shape: f32[2,1,4,324], index: 0, kind: input, shape index: {}]
  %s1 = inlined_call_operand.vmem [shape: f32[2,256], index: 1, kind: input, shape index: {}]
  %s2 = inlined_call_operand.vmem [shape: f32[9,8,4], index: 2, kind: input, shape index: {}]
  %s3 = inlined_call_operand.vmem [shape: f32[8,1], index: 3, kind: input, shape index: {}]
  %s4 = inlined_call_operand.vmem [shape: f32[2,12,256], index: 4, kind: output, shape index: {}]
  %s5 = sld [smem:[#allocation0]]
  $region49: #{make_dilation_dense_forward.1} parent=0
    _
  %s7 = ssub.s32 1, %s5
  %s8 = scalar_select 0, %s7, %s5
  loop: start=0, step=1, limit=4
  $region2: #{make_dilation_dense_forward.1} parent=0 // loop_pre_header
    _
  $region3: #{make_dilation_dense_forward.1} parent=0 // loop_header
    %s10 = sphi 0, %s14
    %p11 = scmp.ge.s32.totalorder %s10, 4
    %s17 = sphi 0, %s29
    %s18 = sphi 0, %s25
    %s19 = sphi 0, %s17
    %s20 = sphi 0, %s18
    %s21 = sphi 0, %s19
    %s22 = sphi 0, %s20
    %s34 = sphi 0, %s36
    %s37 = sphi 0, %s34
    %s38 = sphi 0, %s37
    %s54 = sphi 0, %s38
    %s58 = sphi 0, %s58
    %s60 = sphi 0, %s58
    %s61 = sphi 0, %s60
    %s75 = sphi 0, %s61
    %s79 = sphi 0, %s79
    %s81 = sphi 0, %s79
    %s82 = sphi 0, %s81
    %s96 = sphi 0, %s82
    %s100 = sphi 0, %s100
    %s102 = sphi 0, %s100
    %s103 = sphi 0, %s102
    %s117 = sphi 0, %s103
    %s125 = sphi 0, %s127
    %s128 = sphi 0, %s125
    %s129 = sphi 0, %s128
    %s145 = sphi 0, %s129
  $region4: #{make_dilation_dense_forward.1} parent=0 // loop_header_branch
    %13 = sbr.rel (%p11) target = $region8
  $region5: #{make_dilation_dense_forward.1} parent=0 // loop_body
    %s15 = ssub.s32 %s10, 1
    %s16 = ssub.s32 %s10, 2
    %s23 = sadd.s32 1, %s18
    %p24 = scmp.ge.s32.totalorder %s23, 1
    %s25 = scalar_select %p24, 0, %s23
    %s26 = sadd.s32 1, %s17
    %s27 = scalar_select %p24, %s26, %s17
    %p28 = scmp.ge.s32.totalorder %s27, 2
    %s29 = scalar_select %p28, 0, %s27
    %s30 = ssub.s32 %s17, %s29
    %s31 = ssub.s32 %s18, %s25
    %s32 = sor.u32 %s30, %s31
    %p33 = scmp.eq.s32.totalorder %s32, 0
    %s35 = sadd.s32 %s34, 1
    %s36 = scalar_select %p33, %s34, %s35
    %p39 = pneg %p33
    %p40 = scmp.eq.s32.totalorder %s10, 1
    %p41 = por %p39, %p40
    %p42 = scmp.ne.s32.totalorder %s34, %s37
    %p43 = scmp.eq.s32.totalorder %s10, 0
    %p44 = por %p42, %p43
    %p45 = scmp.ne.s32.totalorder %s34, %s37
    %p46 = scmp.eq.s32.totalorder %s15, 1
    %p47 = por %p45, %p46
    %p48 = scmp.ne.s32.totalorder %s37, %s38
    %p49 = scmp.eq.s32.totalorder %s15, 0
    %p50 = por %p48, %p49
    %p51 = scmp.ne.s32.totalorder %s37, %s38
    %p52 = scmp.eq.s32.totalorder %s16, 1
    %p53 = por %p51, %p52
    %p55 = scmp.ne.s32.totalorder %s38, %s54
    %p56 = scmp.eq.s32.totalorder %s16, 0
    %p57 = por %p55, %p56
    %s59 = sadd.s32 %s58, 1
    %p62 = scmp.eq.s32.totalorder %s10, 1
    %p63 = scmp.ne.s32.totalorder %s58, %s60
    %p64 = scmp.eq.s32.totalorder %s10, 0
    %p65 = por %p63, %p64
    %p66 = scmp.ne.s32.totalorder %s58, %s60
    %p67 = scmp.eq.s32.totalorder %s15, 1
    %p68 = por %p66, %p67
    %p69 = scmp.ne.s32.totalorder %s60, %s61
    %p70 = scmp.eq.s32.totalorder %s15, 0
    %p71 = por %p69, %p70
    %p72 = scmp.ne.s32.totalorder %s60, %s61
    %p73 = scmp.eq.s32.totalorder %s16, 1
    %p74 = por %p72, %p73
    %p76 = scmp.ne.s32.totalorder %s61, %s75
    %p77 = scmp.eq.s32.totalorder %s16, 0
    %p78 = por %p76, %p77
    %s80 = sadd.s32 %s79, 1
    %p83 = scmp.eq.s32.totalorder %s10, 1
    %p84 = scmp.ne.s32.totalorder %s79, %s81
    %p85 = scmp.eq.s32.totalorder %s10, 0
    %p86 = por %p84, %p85
    %p87 = scmp.ne.s32.totalorder %s79, %s81
    %p88 = scmp.eq.s32.totalorder %s15, 1
    %p89 = por %p87, %p88
    %p90 = scmp.ne.s32.totalorder %s81, %s82
    %p91 = scmp.eq.s32.totalorder %s15, 0
    %p92 = por %p90, %p91
    %p93 = scmp.ne.s32.totalorder %s81, %s82
    %p94 = scmp.eq.s32.totalorder %s16, 1
    %p95 = por %p93, %p94
    %p97 = scmp.ne.s32.totalorder %s82, %s96
    %p98 = scmp.eq.s32.totalorder %s16, 0
    %p99 = por %p97, %p98
    %s101 = sadd.s32 %s100, 1
    %p104 = scmp.eq.s32.totalorder %s10, 1
    %p105 = scmp.ne.s32.totalorder %s100, %s102
    %p106 = scmp.eq.s32.totalorder %s10, 0
    %p107 = por %p105, %p106
    %p108 = scmp.ne.s32.totalorder %s100, %s102
    %p109 = scmp.eq.s32.totalorder %s15, 1
    %p110 = por %p108, %p109
    %p111 = scmp.ne.s32.totalorder %s102, %s103
    %p112 = scmp.eq.s32.totalorder %s15, 0
    %p113 = por %p111, %p112
    %p114 = scmp.ne.s32.totalorder %s102, %s103
    %p115 = scmp.eq.s32.totalorder %s16, 1
    %p116 = por %p114, %p115
    %p118 = scmp.ne.s32.totalorder %s103, %s117
    %p119 = scmp.eq.s32.totalorder %s16, 0
    %p120 = por %p118, %p119
    %s121 = ssub.s32 %s17, %s29
    %s122 = ssub.s32 %s18, %s25
    %s123 = sor.u32 %s121, %s122
    %p124 = scmp.eq.s32.totalorder %s123, 0
    %s126 = sadd.s32 %s125, 1
    %s127 = scalar_select %p124, %s125, %s126
    %p130 = pneg %p124
    %p131 = scmp.eq.s32.totalorder %s10, 1
    %p132 = por %p130, %p131
    %p133 = scmp.ne.s32.totalorder %s125, %s128
    %p134 = scmp.eq.s32.totalorder %s10, 0
    %p135 = por %p133, %p134
    %p136 = scmp.ne.s32.totalorder %s125, %s128
    %p137 = scmp.eq.s32.totalorder %s15, 1
    %p138 = por %p136, %p137
    %p139 = scmp.ne.s32.totalorder %s128, %s129
    %p140 = scmp.eq.s32.totalorder %s15, 0
    %p141 = por %p139, %p140
    %p142 = scmp.ne.s32.totalorder %s128, %s129
    %p143 = scmp.eq.s32.totalorder %s16, 1
    %p144 = por %p142, %p143
    %p146 = scmp.ne.s32.totalorder %s129, %s145
    %p147 = scmp.eq.s32.totalorder %s16, 0
    %p148 = por %p146, %p147
    %p149 = scmp.le.s32.totalorder 1, %s10
    %p150 = scmp.lt.s32.totalorder %s10, 3
    %p151 = pnand %p149, %p150
    %p152 = pneg %p151
    // Predicated region
    $region9: #{make_dilation_dense_forward.1} parent=5 // pred_check
      _
    $region10: #{make_dilation_dense_forward.1} parent=5 // pred_check_branch
      %154 = sbr.rel (%p151) target = $region12
    $region11: #{make_dilation_dense_forward.1} parent=5 // pred_region
      %s155 = ssub.s32 %s10, 1
      // Predicated region
      $region13: #{make_dilation_dense_forward.1} parent=11 // pred_check
        %p156 = pneg %p71
      $region14: #{make_dilation_dense_forward.1} parent=11 // pred_check_branch
        %158 = sbr.rel (%p156) target = $region16
      $region15: #{make_dilation_dense_forward.1} parent=11 // pred_region
        _
      $region16: #{make_dilation_dense_forward.1} parent=11 // pred_fallthru
        _
      // Predicated region
      $region17: #{make_dilation_dense_forward.1} parent=11 // pred_check
        %p159 = pneg %p92
      $region18: #{make_dilation_dense_forward.1} parent=11 // pred_check_branch
        %161 = sbr.rel (%p159) target = $region20
      $region19: #{make_dilation_dense_forward.1} parent=11 // pred_region
        _
      $region20: #{make_dilation_dense_forward.1} parent=11 // pred_fallthru
        _
      // Predicated region
      $region21: #{make_dilation_dense_forward.1} parent=11 // pred_check
        %p162 = pneg %p113
      $region22: #{make_dilation_dense_forward.1} parent=11 // pred_check_branch
        %164 = sbr.rel (%p162) target = $region24
      $region23: #{make_dilation_dense_forward.1} parent=11 // pred_region
        _
      $region24: #{make_dilation_dense_forward.1} parent=11 // pred_fallthru
        _
    $region12: #{make_dilation_dense_forward.1} parent=5 // pred_fallthru
      _
    %p165 = scmp.lt.s32.totalorder %s10, 2
    // Predicated region
    $region25: #{make_dilation_dense_forward.1} parent=5 // pred_check
      %p166 = pneg %p165
    $region26: #{make_dilation_dense_forward.1} parent=5 // pred_check_branch
      %168 = sbr.rel (%p166) target = $region28
    $region27: #{make_dilation_dense_forward.1} parent=5 // pred_region
      // Predicated region
      $region29: #{make_dilation_dense_forward.1} parent=27 // pred_check
        %p169 = pneg %p44
      $region30: #{make_dilation_dense_forward.1} parent=27 // pred_check_branch
        %171 = sbr.rel (%p169) target = $region32
      $region31: #{make_dilation_dense_forward.1} parent=27 // pred_region
        %p172 = scmp.lt.s32.totalorder %s17, 1
        %s173 = scalar_select %p172, %s17, 1
        %p174 = scmp.lt.s32.totalorder %s18, 0
        %s175 = scalar_select %p174, %s18, 0
        %s176 = smul.addr %s175, 3
        %s177 = smul.addr %s173, 3
        %s178 = sadd.s32 %s176, %s177
        %s179 = smul.addr %s178, 4
        %s180 = scalar_lea.vmem %s0, %s179
      $region32: #{make_dilation_dense_forward.1} parent=27 // pred_fallthru
        _
    $region28: #{make_dilation_dense_forward.1} parent=5 // pred_fallthru
      _
    %p181 = scmp.le.s32.totalorder 1, %s10
    %p182 = scmp.lt.s32.totalorder %s10, 3
    %p183 = pnand %p181, %p182
    %p184 = pneg %p183
    // Predicated region
    $region33: #{make_dilation_dense_forward.1} parent=5 // pred_check
      _
    $region34: #{make_dilation_dense_forward.1} parent=5 // pred_check_branch
      %186 = sbr.rel (%p183) target = $region36
    $region35: #{make_dilation_dense_forward.1} parent=5 // pred_region
      %s187 = ssub.s32 %s10, 1
      %p188 = scmp.lt.s32.totalorder %s19, 1
      %s189 = scalar_select %p188, %s19, 1
      %p190 = scmp.lt.s32.totalorder %s20, 0
      %s191 = scalar_select %p190, %s20, 0
      %s192 = smul.addr %s191, 3
      %s193 = smul.addr %s189, 3
      %s194 = sadd.s32 %s192, %s193
      %s195 = smul.addr %s194, 4
      %s196 = scalar_lea.vmem %s0, %s195
      %p197 = pneg %p50
      %p198 = pneg %p47
      %p199 = pneg %p71
      %p200 = pneg %p68
      %p201 = pneg %p92
      %p202 = pneg %p89
      %p203 = pneg %p113
      %p204 = pneg %p110
      %p205 = pneg %p141
      %p206 = pneg %p138
      %s207 = smul.u32 2, %s20
      %p208 = scmp.lt.s32.totalorder %s19, 1
      %s209 = scalar_select %p208, %s19, 1
      %p210 = scmp.lt.s32.totalorder %s207, 1
      %s211 = scalar_select %p210, %s207, 1
      %s212 = smul.addr %s209, 4
      %s213 = sadd.s32 %s211, %s212
      %s214 = smul.addr %s213, 8
      %s215 = scalar_lea.vmem %s4, %s214
      %p216 = scmp.lt.s32.totalorder %s19, 1
      %s217 = scalar_select %p216, %s19, 1
      %p218 = scmp.lt.s32.totalorder %s20, 0
      %s219 = scalar_select %p218, %s20, 0
      %s220 = smul.addr %s219, 3
      %s221 = smul.addr %s217, 3
      %s222 = sadd.s32 %s220, %s221
      %s223 = smul.addr %s222, 4
      %s224 = scalar_lea.vmem %s0, %s223
      %s225 = smul.u32 2, %s20
      %p226 = scmp.lt.s32.totalorder %s19, 1
      %s227 = scalar_select %p226, %s19, 1
      %p228 = scmp.lt.s32.totalorder %s225, 1
      %s229 = scalar_select %p228, %s225, 1
      %s230 = smul.addr %s227, 4
      %s231 = sadd.s32 %s229, %s230
      %s232 = smul.addr %s231, 8
      %s233 = scalar_lea.vmem %s4, %s232
      %s234 = smul.u32 2, %s20
      %v235 = vld [vmem:[%s3] sm:$0xff]
      %237 = vset.pattern.permute.xlu0 0
      %238 = vperm.xlu0 %237, %v235
      %v239 = vpop.permute.xlu0 %238
      %v241 = vld [vmem:[%s224] sm:$0xff]
      %v242 = vld [vmem:[%s1] ss:$2 sm:$0x3]
      %v244 = vlaneseq
      %v245 = vshrl.u32 %v244, 7
      %v246 = vsub.s32 0, %v245
      %v247 = vrot.slane %v242, %v246
      %v248 = vlaneseq
      %v249 = vshrl.u32 %v248, 7
      %v250 = vsub.s32 1, %v249
      %v251 = vrot.slane %v242, %v250
      %v252 = vcombine.low %v247, %v251
      %v254 = vmul.f32 %v241, %v252
      %v255 = vld [vmem:[%s2] sm:$0xff]
      %v257 = vcombine.high %v254, %v254
      %vm258 = vcmask 31744
      %v260 = vsel %vm258, %v255, 0
      %vm262 = vcmask 1043456
      %v263 = vsel %vm262, %v254, 0
      %v265 = vsel %vm262, %v257, 0
      %267 = vmatprep.subr.mxu0 %v265
      %268 = vmatpush1.msra.mxu0 %v263
      %269 = vmatprep.subr.mxu0 0.0
      %270 = vmatpush1.msra.mxu0 0.0
      %271 = vmatprep.subr.mxu0 0.0
      %272 = vmatpush1.msra.mxu0 0.0
      %273 = vmatprep.subr.mxu0 0.0
      %274 = vmatpush1.msra.mxu0 0.0
      %275 = vmatprep.subr.mxu0 0.0
      %276 = vmatpush1.msra.mxu0 0.0
      %277 = vmatprep.subr.mxu0 0.0
      %278 = vmatpush1.msra.mxu0 0.0
      %279 = vmatprep.subr.mxu0 0.0
      %280 = vmatpush1.msra.mxu0 0.0
      %281 = vmatprep.subr.mxu0 0.0
      %282 = vmatpush1.msra.mxu0 0.0
      %283 = vmatprep.subr.mxu0 0.0
      %284 = vmatpush1.msra.mxu0 0.0
      %285 = vmatprep.subr.mxu0 0.0
      %286 = vmatpush1.msra.mxu0 0.0
      %287 = vmatprep.subr.mxu0 0.0
      %288 = vmatpush1.msra.mxu0 0.0
      %289 = vmatprep.subr.mxu0 0.0
      %290 = vmatpush1.msra.mxu0 0.0
      %291 = vmatprep.subr.mxu0 0.0
      %292 = vmatpush1.msra.mxu0 0.0
      %293 = vmatprep.subr.mxu0 0.0
      %294 = vmatpush1.msra.mxu0 0.0
      %295 = vmatprep.subr.mxu0 0.0
      %296 = vmatpush1.msra.mxu0 0.0
      %297 = vmatprep.subr.mxu0 0.0
      %298 = vmatpush1.msra.mxu0 0.0
      %299 = vmatprep.subr.mxu0 0.0
      %300 = vmatpush1.msra.mxu0 0.0
      %301 = vmatprep.subr.mxu0 0.0
      %302 = vmatpush1.msra.mxu0 0.0
      %303 = vmatprep.subr.mxu0 0.0
      %304 = vmatpush1.msra.mxu0 0.0
      %305 = vmatprep.subr.mxu0 0.0
      %306 = vmatpush1.msra.mxu0 0.0
      %307 = vmatprep.subr.mxu0 0.0
      %308 = vmatpush1.msra.mxu0 0.0
      %309 = vmatprep.subr.mxu0 0.0
      %310 = vmatpush1.msra.mxu0 0.0
      %311 = vmatprep.subr.mxu0 0.0
      %312 = vmatpush1.msra.mxu0 0.0
      %313 = vmatprep.subr.mxu0 0.0
      %314 = vmatpush1.msra.mxu0 0.0
      %315 = vmatprep.subr.mxu0 0.0
      %316 = vmatpush1.msra.mxu0 0.0
      %317 = vmatprep.subr.mxu0 0.0
      %318 = vmatpush1.msra.mxu0 0.0
      %319 = vmatprep.subr.mxu0 0.0
      %320 = vmatpush1.msra.mxu0 0.0
      %321 = vmatprep.subr.mxu0 0.0
      %322 = vmatpush1.msra.mxu0 0.0
      %323 = vmatprep.subr.mxu0 0.0
      %324 = vmatpush1.msra.mxu0 0.0
      %325 = vmatprep.subr.mxu0 0.0
      %326 = vmatpush1.msra.mxu0 0.0
      %327 = vmatprep.subr.mxu0 0.0
      %328 = vmatpush1.msra.mxu0 0.0
      %329 = vmatprep.subr.mxu0 0.0
      %330 = vmatpush1.msra.mxu0 0.0
      %331 = vmatprep.mubr.f32.mxu0 0.0
      %332 = vmatmul.mubr.f32.gmra.mrb[0].mxu0 %v260
      %v333 = vpop.f32.mrb[0].mxu0
      %v334 = vadd.f32 0.0, %v333
      %v335 = vpop.f32.mrb[0].mxu0
      %v336 = vadd.f32 0.0, %v335
      %337 = vdwg.mxu0
      %v338 = vadd.f32 %v239, %v334
      %v339 = vadd.f32 %v239, %v336
      %v340 = vld [vmem:[%s224] sm:$0xff]
      %v341 = vld [vmem:[%s224 + $0x8] sm:$0xf]
      %s342 = scalar_lea.vmem %s2, 8
      %v343 = vld [vmem:[%s342] sm:$0xff]
      %v346 = vcombine.high %v340, %v340
      %347 = vrot.lane.b32.xlu0 %v340, 126
      %v348 = vpop.permute.xlu0 %347
      %349 = vrot.lane.b32.xlu0 %v346, 126
      %v350 = vpop.permute.xlu0 %349
      %351 = vrot.lane.b32.xlu0 %v341, 126
      %v352 = vpop.permute.xlu0 %351
      %vm353 = vcmask 1031168
      %v354 = vsel %vm353, %v348, %v350
      %v355 = vsel %vm353, %v350, %v352
      %v357 = vsel %vm258, %v343, 0
      %v359 = vsel %vm262, %v354, 0
      %v361 = vsel %vm262, %v355, 0
      %363 = vmatprep.subr.mxu0 %v361
      %364 = vmatpush1.msra.mxu0 %v359
      %365 = vmatprep.subr.mxu0 0.0
      %366 = vmatpush1.msra.mxu0 0.0
      %367 = vmatprep.subr.mxu0 0.0
      %368 = vmatpush1.msra.mxu0 0.0
      %369 = vmatprep.subr.mxu0 0.0
      %370 = vmatpush1.msra.mxu0 0.0
      %371 = vmatprep.subr.mxu0 0.0
      %372 = vmatpush1.msra.mxu0 0.0
      %373 = vmatprep.subr.mxu0 0.0
      %374 = vmatpush1.msra.mxu0 0.0
      %375 = vmatprep.subr.mxu0 0.0
      %376 = vmatpush1.msra.mxu0 0.0
      %377 = vmatprep.subr.mxu0 0.0
      %378 = vmatpush1.msra.mxu0 0.0
      %379 = vmatprep.subr.mxu0 0.0
      %380 = vmatpush1.msra.mxu0 0.0
      %381 = vmatprep.subr.mxu0 0.0
      %382 = vmatpush1.msra.mxu0 0.0
      %383 = vmatprep.subr.mxu0 0.0
      %384 = vmatpush1.msra.mxu0 0.0
      %385 = vmatprep.subr.mxu0 0.0
      %386 = vmatpush1.msra.mxu0 0.0
      %387 = vmatprep.subr.mxu0 0.0
      %388 = vmatpush1.msra.mxu0 0.0
      %389 = vmatprep.subr.mxu0 0.0
      %390 = vmatpush1.msra.mxu0 0.0
      %391 = vmatprep.subr.mxu0 0.0
      %392 = vmatpush1.msra.mxu0 0.0
      %393 = vmatprep.subr.mxu0 0.0
      %394 = vmatpush1.msra.mxu0 0.0
      %395 = vmatprep.subr.mxu0 0.0
      %396 = vmatpush1.msra.mxu0 0.0
      %397 = vmatprep.subr.mxu0 0.0
      %398 = vmatpush1.msra.mxu0 0.0
      %399 = vmatprep.subr.mxu0 0.0
      %400 = vmatpush1.msra.mxu0 0.0
      %401 = vmatprep.subr.mxu0 0.0
      %402 = vmatpush1.msra.mxu0 0.0
      %403 = vmatprep.subr.mxu0 0.0
      %404 = vmatpush1.msra.mxu0 0.0
      %405 = vmatprep.subr.mxu0 0.0
      %406 = vmatpush1.msra.mxu0 0.0
      %407 = vmatprep.subr.mxu0 0.0
      %408 = vmatpush1.msra.mxu0 0.0
      %409 = vmatprep.subr.mxu0 0.0
      %410 = vmatpush1.msra.mxu0 0.0
      %411 = vmatprep.subr.mxu0 0.0
      %412 = vmatpush1.msra.mxu0 0.0
      %413 = vmatprep.subr.mxu0 0.0
      %414 = vmatpush1.msra.mxu0 0.0
      %415 = vmatprep.subr.mxu0 0.0
      %416 = vmatpush1.msra.mxu0 0.0
      %417 = vmatprep.subr.mxu0 0.0
      %418 = vmatpush1.msra.mxu0 0.0
      %419 = vmatprep.subr.mxu0 0.0
      %420 = vmatpush1.msra.mxu0 0.0
      %421 = vmatprep.subr.mxu0 0.0
      %422 = vmatpush1.msra.mxu0 0.0
      %423 = vmatprep.subr.mxu0 0.0
      %424 = vmatpush1.msra.mxu0 0.0
      %425 = vmatprep.subr.mxu0 0.0
      %426 = vmatpush1.msra.mxu0 0.0
      %427 = vmatprep.mubr.f32.mxu0 0.0
      %428 = vmatmul.mubr.f32.gmra.mrb[0].mxu0 %v357
      %v429 = vpop.f32.mrb[0].mxu0
      %v430 = vadd.f32 0.0, %v429
      %v431 = vpop.f32.mrb[0].mxu0
      %v432 = vadd.f32 0.0, %v431
      %433 = vdwg.mxu0
      %v434 = vadd.f32 %v338, %v430
      %v435 = vadd.f32 %v339, %v432
      %v436 = vld [vmem:[%s224] sm:$0xff]
      %v437 = vld [vmem:[%s224 + $0x8] sm:$0xf]
      %s438 = scalar_lea.vmem %s1, 1
      %v439 = vld [vmem:[%s438] ss:$2 sm:$0x3]
      %v441 = vlaneseq
      %v442 = vshrl.u32 %v441, 7
      %v443 = vsub.s32 0, %v442
      %v444 = vrot.slane %v439, %v443
      %v445 = vlaneseq
      %v446 = vshrl.u32 %v445, 7
      %v447 = vsub.s32 1, %v446
      %v448 = vrot.slane %v439, %v447
      %v449 = vcombine.low %v444, %v448
      %450 = vrot.lane.b32.xlu0 %v449, 4
      %v451 = vpop.permute.xlu0 %450
      %v452 = vrot.slane %v451, 4
      %v453 = vsel %vm258, %v452, %v451
      %v456 = vmul.f32 %v436, %v453
      %v457 = vmul.f32 %v437, %v452
      %s458 = scalar_lea.vmem %s2, 16
      %v459 = vld [vmem:[%s458] sm:$0xff]
      %v462 = vcombine.high %v456, %v456
      %463 = vrot.lane.b32.xlu0 %v456, 124
      %v464 = vpop.permute.xlu0 %463
      %465 = vrot.lane.b32.xlu0 %v462, 124
      %v466 = vpop.permute.xlu0 %465
      %467 = vrot.lane.b32.xlu0 %v457, 124
      %v468 = vpop.permute.xlu0 %467
      %vm469 = vcmask 1014784
      %v470 = vsel %vm469, %v464, %v466
      %v471 = vsel %vm469, %v466, %v468
      %v473 = vsel %vm258, %v459, 0
      %v475 = vsel %vm262, %v470, 0
      %v477 = vsel %vm262, %v471, 0
      %479 = vmatprep.subr.mxu0 %v477
      %480 = vmatpush1.msra.mxu0 %v475
      %481 = vmatprep.subr.mxu0 0.0
      %482 = vmatpush1.msra.mxu0 0.0
      %483 = vmatprep.subr.mxu0 0.0
      %484 = vmatpush1.msra.mxu0 0.0
      %485 = vmatprep.subr.mxu0 0.0
      %486 = vmatpush1.msra.mxu0 0.0
      %487 = vmatprep.subr.mxu0 0.0
      %488 = vmatpush1.msra.mxu0 0.0
      %489 = vmatprep.subr.mxu0 0.0
      %490 = vmatpush1.msra.mxu0 0.0
      %491 = vmatprep.subr.mxu0 0.0
      %492 = vmatpush1.msra.mxu0 0.0
      %493 = vmatprep.subr.mxu0 0.0
      %494 = vmatpush1.msra.mxu0 0.0
      %495 = vmatprep.subr.mxu0 0.0
      %496 = vmatpush1.msra.mxu0 0.0
      %497 = vmatprep.subr.mxu0 0.0
      %498 = vmatpush1.msra.mxu0 0.0
      %499 = vmatprep.subr.mxu0 0.0
      %500 = vmatpush1.msra.mxu0 0.0
      %501 = vmatprep.subr.mxu0 0.0
      %502 = vmatpush1.msra.mxu0 0.0
      %503 = vmatprep.subr.mxu0 0.0
      %504 = vmatpush1.msra.mxu0 0.0
      %505 = vmatprep.subr.mxu0 0.0
      %506 = vmatpush1.msra.mxu0 0.0
      %507 = vmatprep.subr.mxu0 0.0
      %508 = vmatpush1.msra.mxu0 0.0
      %509 = vmatprep.subr.mxu0 0.0
      %510 = vmatpush1.msra.mxu0 0.0
      %511 = vmatprep.subr.mxu0 0.0
      %512 = vmatpush1.msra.mxu0 0.0
      %513 = vmatprep.subr.mxu0 0.0
      %514 = vmatpush1.msra.mxu0 0.0
      %515 = vmatprep.subr.mxu0 0.0
      %516 = vmatpush1.msra.mxu0 0.0
      %517 = vmatprep.subr.mxu0 0.0
      %518 = vmatpush1.msra.mxu0 0.0
      %519 = vmatprep.subr.mxu0 0.0
      %520 = vmatpush1.msra.mxu0 0.0
      %521 = vmatprep.subr.mxu0 0.0
      %522 = vmatpush1.msra.mxu0 0.0
      %523 = vmatprep.subr.mxu0 0.0
      %524 = vmatpush1.msra.mxu0 0.0
      %525 = vmatprep.subr.mxu0 0.0
      %526 = vmatpush1.msra.mxu0 0.0
      %527 = vmatprep.subr.mxu0 0.0
      %528 = vmatpush1.msra.mxu0 0.0
      %529 = vmatprep.subr.mxu0 0.0
      %530 = vmatpush1.msra.mxu0 0.0
      %531 = vmatprep.subr.mxu0 0.0
      %532 = vmatpush1.msra.mxu0 0.0
      %533 = vmatprep.subr.mxu0 0.0
      %534 = vmatpush1.msra.mxu0 0.0
      %535 = vmatprep.subr.mxu0 0.0
      %536 = vmatpush1.msra.mxu0 0.0
      %537 = vmatprep.subr.mxu0 0.0
      %538 = vmatpush1.msra.mxu0 0.0
      %539 = vmatprep.subr.mxu0 0.0
      %540 = vmatpush1.msra.mxu0 0.0
      %541 = vmatprep.subr.mxu0 0.0
      %542 = vmatpush1.msra.mxu0 0.0
      %543 = vmatprep.mubr.f32.mxu0 0.0
      %544 = vmatmul.mubr.f32.gmra.mrb[0].mxu0 %v473
      %v545 = vpop.f32.mrb[0].mxu0
      %v546 = vadd.f32 0.0, %v545
      %v547 = vpop.f32.mrb[0].mxu0
      %v548 = vadd.f32 0.0, %v547
      %549 = vdwg.mxu0
      %v550 = vadd.f32 %v434, %v546
      %v551 = vadd.f32 %v435, %v548
      %v552 = vld [vmem:[%s224] sm:$0xff]
      %v553 = vld [vmem:[%s224 + $0x8] sm:$0xf]
      %554 = vrot.lane.b32.xlu0 %v252, 32
      %v555 = vpop.permute.xlu0 %554
      %v556 = vrot.slane %v555, 4
      %vm557 = vcmask 261120
      %v558 = vsel %vm557, %v556, %v555
      %v561 = vmul.f32 %v552, %v558
      %v562 = vmul.f32 %v553, %v556
      %s563 = scalar_lea.vmem %s2, 24
      %v564 = vld [vmem:[%s563] sm:$0xff]
      %v567 = vcombine.high %v561, %v561
      %568 = vrot.lane.b32.xlu0 %v561, 96
      %v569 = vpop.permute.xlu0 %568
      %570 = vrot.lane.b32.xlu0 %v567, 96
      %v571 = vpop.permute.xlu0 %570
      %572 = vrot.lane.b32.xlu0 %v562, 96
      %v573 = vpop.permute.xlu0 %572
      %vm574 = vcmask 785408
      %v575 = vsel %vm574, %v569, %v571
      %v576 = vsel %vm574, %v571, %v573
      %v578 = vsel %vm258, %v564, 0
      %v580 = vsel %vm262, %v575, 0
      %v582 = vsel %vm262, %v576, 0
      %584 = vmatprep.subr.mxu0 %v582
      %585 = vmatpush1.msra.mxu0 %v580
      %586 = vmatprep.subr.mxu0 0.0
      %587 = vmatpush1.msra.mxu0 0.0
      %588 = vmatprep.subr.mxu0 0.0
      %589 = vmatpush1.msra.mxu0 0.0
      %590 = vmatprep.subr.mxu0 0.0
      %591 = vmatpush1.msra.mxu0 0.0
      %592 = vmatprep.subr.mxu0 0.0
      %593 = vmatpush1.msra.mxu0 0.0
      %594 = vmatprep.subr.mxu0 0.0
      %595 = vmatpush1.msra.mxu0 0.0
      %596 = vmatprep.subr.mxu0 0.0
      %597 = vmatpush1.msra.mxu0 0.0
      %598 = vmatprep.subr.mxu0 0.0
      %599 = vmatpush1.msra.mxu0 0.0
      %600 = vmatprep.subr.mxu0 0.0
      %601 = vmatpush1.msra.mxu0 0.0
      %602 = vmatprep.subr.mxu0 0.0
      %603 = vmatpush1.msra.mxu0 0.0
      %604 = vmatprep.subr.mxu0 0.0
      %605 = vmatpush1.msra.mxu0 0.0
      %606 = vmatprep.subr.mxu0 0.0
      %607 = vmatpush1.msra.mxu0 0.0
      %608 = vmatprep.subr.mxu0 0.0
      %609 = vmatpush1.msra.mxu0 0.0
      %610 = vmatprep.subr.mxu0 0.0
      %611 = vmatpush1.msra.mxu0 0.0
      %612 = vmatprep.subr.mxu0 0.0
      %613 = vmatpush1.msra.mxu0 0.0
      %614 = vmatprep.subr.mxu0 0.0
      %615 = vmatpush1.msra.mxu0 0.0
      %616 = vmatprep.subr.mxu0 0.0
      %617 = vmatpush1.msra.mxu0 0.0
      %618 = vmatprep.subr.mxu0 0.0
      %619 = vmatpush1.msra.mxu0 0.0
      %620 = vmatprep.subr.mxu0 0.0
      %621 = vmatpush1.msra.mxu0 0.0
      %622 = vmatprep.subr.mxu0 0.0
      %623 = vmatpush1.msra.mxu0 0.0
      %624 = vmatprep.subr.mxu0 0.0
      %625 = vmatpush1.msra.mxu0 0.0
      %626 = vmatprep.subr.mxu0 0.0
      %627 = vmatpush1.msra.mxu0 0.0
      %628 = vmatprep.subr.mxu0 0.0
      %629 = vmatpush1.msra.mxu0 0.0
      %630 = vmatprep.subr.mxu0 0.0
      %631 = vmatpush1.msra.mxu0 0.0
      %632 = vmatprep.subr.mxu0 0.0
      %633 = vmatpush1.msra.mxu0 0.0
      %634 = vmatprep.subr.mxu0 0.0
      %635 = vmatpush1.msra.mxu0 0.0
      %636 = vmatprep.subr.mxu0 0.0
      %637 = vmatpush1.msra.mxu0 0.0
      %638 = vmatprep.subr.mxu0 0.0
      %639 = vmatpush1.msra.mxu0 0.0
      %640 = vmatprep.subr.mxu0 0.0
      %641 = vmatpush1.msra.mxu0 0.0
      %642 = vmatprep.subr.mxu0 0.0
      %643 = vmatpush1.msra.mxu0 0.0
      %644 = vmatprep.subr.mxu0 0.0
      %645 = vmatpush1.msra.mxu0 0.0
      %646 = vmatprep.subr.mxu0 0.0
      %647 = vmatpush1.msra.mxu0 0.0
      %648 = vmatprep.mubr.f32.mxu0 0.0
      %649 = vmatmul.mubr.f32.gmra.mrb[0].mxu0 %v578
      %v650 = vpop.f32.mrb[0].mxu0
      %v651 = vadd.f32 0.0, %v650
      %v652 = vpop.f32.mrb[0].mxu0
      %v653 = vadd.f32 0.0, %v652
      %654 = vdwg.mxu0
      %v655 = vadd.f32 %v550, %v651
      %v656 = vadd.f32 %v551, %v653
      %v657 = vld [vmem:[%s224] sm:$0xff]
      %v658 = vld [vmem:[%s224 + $0x8] sm:$0xf]
      %s659 = scalar_lea.vmem %s2, 32
      %v660 = vld [vmem:[%s659] sm:$0xff]
      %v663 = vcombine.high %v657, %v657
      %664 = vrot.lane.b32.xlu0 %v657, 94
      %v665 = vpop.permute.xlu0 %664
      %666 = vrot.lane.b32.xlu0 %v663, 94
      %v667 = vpop.permute.xlu0 %666
      %668 = vrot.lane.b32.xlu0 %v658, 94
      %v669 = vpop.permute.xlu0 %668
      %vm670 = vcmask 769024
      %v671 = vsel %vm670, %v665, %v667
      %v672 = vsel %vm670, %v667, %v669
      %v674 = vsel %vm258, %v660, 0
      %v676 = vsel %vm262, %v671, 0
      %v678 = vsel %vm262, %v672, 0
      %680 = vmatprep.subr.mxu0 %v678
      %681 = vmatpush1.msra.mxu0 %v676
      %682 = vmatprep.subr.mxu0 0.0
      %683 = vmatpush1.msra.mxu0 0.0
      %684 = vmatprep.subr.mxu0 0.0
      %685 = vmatpush1.msra.mxu0 0.0
      %686 = vmatprep.subr.mxu0 0.0
      %687 = vmatpush1.msra.mxu0 0.0
      %688 = vmatprep.subr.mxu0 0.0
      %689 = vmatpush1.msra.mxu0 0.0
      %690 = vmatprep.subr.mxu0 0.0
      %691 = vmatpush1.msra.mxu0 0.0
      %692 = vmatprep.subr.mxu0 0.0
      %693 = vmatpush1.msra.mxu0 0.0
      %694 = vmatprep.subr.mxu0 0.0
      %695 = vmatpush1.msra.mxu0 0.0
      %696 = vmatprep.subr.mxu0 0.0
      %697 = vmatpush1.msra.mxu0 0.0
      %698 = vmatprep.subr.mxu0 0.0
      %699 = vmatpush1.msra.mxu0 0.0
      %700 = vmatprep.subr.mxu0 0.0
      %701 = vmatpush1.msra.mxu0 0.0
      %702 = vmatprep.subr.mxu0 0.0
      %703 = vmatpush1.msra.mxu0 0.0
      %704 = vmatprep.subr.mxu0 0.0
      %705 = vmatpush1.msra.mxu0 0.0
      %706 = vmatprep.subr.mxu0 0.0
      %707 = vmatpush1.msra.mxu0 0.0
      %708 = vmatprep.subr.mxu0 0.0
      %709 = vmatpush1.msra.mxu0 0.0
      %710 = vmatprep.subr.mxu0 0.0
      %711 = vmatpush1.msra.mxu0 0.0
      %712 = vmatprep.subr.mxu0 0.0
      %713 = vmatpush1.msra.mxu0 0.0
      %714 = vmatprep.subr.mxu0 0.0
      %715 = vmatpush1.msra.mxu0 0.0
      %716 = vmatprep.subr.mxu0 0.0
      %717 = vmatpush1.msra.mxu0 0.0
      %718 = vmatprep.subr.mxu0 0.0
      %719 = vmatpush1.msra.mxu0 0.0
      %720 = vmatprep.subr.mxu0 0.0
      %721 = vmatpush1.msra.mxu0 0.0
      %722 = vmatprep.subr.mxu0 0.0
      %723 = vmatpush1.msra.mxu0 0.0
      %724 = vmatprep.subr.mxu0 0.0
      %725 = vmatpush1.msra.mxu0 0.0
      %726 = vmatprep.subr.mxu0 0.0
      %727 = vmatpush1.msra.mxu0 0.0
      %728 = vmatprep.subr.mxu0 0.0
      %729 = vmatpush1.msra.mxu0 0.0
      %730 = vmatprep.subr.mxu0 0.0
      %731 = vmatpush1.msra.mxu0 0.0
      %732 = vmatprep.subr.mxu0 0.0
      %733 = vmatpush1.msra.mxu0 0.0
      %734 = vmatprep.subr.mxu0 0.0
      %735 = vmatpush1.msra.mxu0 0.0
      %736 = vmatprep.subr.mxu0 0.0
      %737 = vmatpush1.msra.mxu0 0.0
      %738 = vmatprep.subr.mxu0 0.0
      %739 = vmatpush1.msra.mxu0 0.0
      %740 = vmatprep.subr.mxu0 0.0
      %741 = vmatpush1.msra.mxu0 0.0
      %742 = vmatprep.subr.mxu0 0.0
      %743 = vmatpush1.msra.mxu0 0.0
      %744 = vmatprep.mubr.f32.mxu0 0.0
      %745 = vmatmul.mubr.f32.gmra.mrb[0].mxu0 %v674
      %v746 = vpop.f32.mrb[0].mxu0
      %v747 = vadd.f32 0.0, %v746
      %v748 = vpop.f32.mrb[0].mxu0
      %v749 = vadd.f32 0.0, %v748
      %750 = vdwg.mxu0
      %v751 = vadd.f32 %v655, %v747
      %v752 = vadd.f32 %v656, %v749
      %v753 = vld [vmem:[%s224] sm:$0xff]
      %v754 = vld [vmem:[%s224 + $0x8] sm:$0xf]
      %755 = vrot.lane.b32.xlu0 %v449, 36
      %v756 = vpop.permute.xlu0 %755
      %v757 = vrot.slane %v756, 4
      %vm758 = vcmask 293888
      %v759 = vsel %vm758, %v757, %v756
      %v762 = vmul.f32 %v753, %v759
      %v763 = vmul.f32 %v754, %v757
      %s764 = scalar_lea.vmem %s2, 40
      %v765 = vld [vmem:[%s764] sm:$0xff]
      %v768 = vcombine.high %v762, %v762
      %769 = vrot.lane.b32.xlu0 %v762, 92
      %v770 = vpop.permute.xlu0 %769
      %771 = vrot.lane.b32.xlu0 %v768, 92
      %v772 = vpop.permute.xlu0 %771
      %773 = vrot.lane.b32.xlu0 %v763, 92
      %v774 = vpop.permute.xlu0 %773
      %vm775 = vcmask 752640
      %v776 = vsel %vm775, %v770, %v772
      %v777 = vsel %vm775, %v772, %v774
      %v779 = vsel %vm258, %v765, 0
      %v781 = vsel %vm262, %v776, 0
      %v783 = vsel %vm262, %v777, 0
      %785 = vmatprep.subr.mxu0 %v783
      %786 = vmatpush1.msra.mxu0 %v781
      %787 = vmatprep.subr.mxu0 0.0
      %788 = vmatpush1.msra.mxu0 0.0
      %789 = vmatprep.subr.mxu0 0.0
      %790 = vmatpush1.msra.mxu0 0.0
      %791 = vmatprep.subr.mxu0 0.0
      %792 = vmatpush1.msra.mxu0 0.0
      %793 = vmatprep.subr.mxu0 0.0
      %794 = vmatpush1.msra.mxu0 0.0
      %795 = vmatprep.subr.mxu0 0.0
      %796 = vmatpush1.msra.mxu0 0.0
      %797 = vmatprep.subr.mxu0 0.0
      %798 = vmatpush1.msra.mxu0 0.0
      %799 = vmatprep.subr.mxu0 0.0
      %800 = vmatpush1.msra.mxu0 0.0
      %801 = vmatprep.subr.mxu0 0.0
      %802 = vmatpush1.msra.mxu0 0.0
      %803 = vmatprep.subr.mxu0 0.0
      %804 = vmatpush1.msra.mxu0 0.0
      %805 = vmatprep.subr.mxu0 0.0
      %806 = vmatpush1.msra.mxu0 0.0
      %807 = vmatprep.subr.mxu0 0.0
      %808 = vmatpush1.msra.mxu0 0.0
      %809 = vmatprep.subr.mxu0 0.0
      %810 = vmatpush1.msra.mxu0 0.0
      %811 = vmatprep.subr.mxu0 0.0
      %812 = vmatpush1.msra.mxu0 0.0
      %813 = vmatprep.subr.mxu0 0.0
      %814 = vmatpush1.msra.mxu0 0.0
      %815 = vmatprep.subr.mxu0 0.0
      %816 = vmatpush1.msra.mxu0 0.0
      %817 = vmatprep.subr.mxu0 0.0
      %818 = vmatpush1.msra.mxu0 0.0
      %819 = vmatprep.subr.mxu0 0.0
      %820 = vmatpush1.msra.mxu0 0.0
      %821 = vmatprep.subr.mxu0 0.0
      %822 = vmatpush1.msra.mxu0 0.0
      %823 = vmatprep.subr.mxu0 0.0
      %824 = vmatpush1.msra.mxu0 0.0
      %825 = vmatprep.subr.mxu0 0.0
      %826 = vmatpush1.msra.mxu0 0.0
      %827 = vmatprep.subr.mxu0 0.0
      %828 = vmatpush1.msra.mxu0 0.0
      %829 = vmatprep.subr.mxu0 0.0
      %830 = vmatpush1.msra.mxu0 0.0
      %831 = vmatprep.subr.mxu0 0.0
      %832 = vmatpush1.msra.mxu0 0.0
      %833 = vmatprep.subr.mxu0 0.0
      %834 = vmatpush1.msra.mxu0 0.0
      %835 = vmatprep.subr.mxu0 0.0
      %836 = vmatpush1.msra.mxu0 0.0
      %837 = vmatprep.subr.mxu0 0.0
      %838 = vmatpush1.msra.mxu0 0.0
      %839 = vmatprep.subr.mxu0 0.0
      %840 = vmatpush1.msra.mxu0 0.0
      %841 = vmatprep.subr.mxu0 0.0
      %842 = vmatpush1.msra.mxu0 0.0
      %843 = vmatprep.subr.mxu0 0.0
      %844 = vmatpush1.msra.mxu0 0.0
      %845 = vmatprep.subr.mxu0 0.0
      %846 = vmatpush1.msra.mxu0 0.0
      %847 = vmatprep.subr.mxu0 0.0
      %848 = vmatpush1.msra.mxu0 0.0
      %849 = vmatprep.mubr.f32.mxu0 0.0
      %850 = vmatmul.mubr.f32.gmra.mrb[0].mxu0 %v779
      %v851 = vpop.f32.mrb[0].mxu0
      %v852 = vadd.f32 0.0, %v851
      %v853 = vpop.f32.mrb[0].mxu0
      %v854 = vadd.f32 0.0, %v853
      %855 = vdwg.mxu0
      %v856 = vadd.f32 %v751, %v852
      %v857 = vadd.f32 %v752, %v854
      %v858 = vld [vmem:[%s224] sm:$0xff]
      %v859 = vld [vmem:[%s224 + $0x8] sm:$0xf]
      %860 = vrot.lane.b32.xlu0 %v252, 64
      %v861 = vpop.permute.xlu0 %860
      %v862 = vrot.slane %v861, 4
      %vm863 = vcmask 523264
      %v864 = vsel %vm863, %v862, %v861
      %v867 = vmul.f32 %v858, %v864
      %v868 = vmul.f32 %v859, %v862
      %s869 = scalar_lea.vmem %s2, 48
      %v870 = vld [vmem:[%s869] sm:$0xff]
      %v873 = vcombine.high %v867, %v867
      %874 = vrot.lane.b32.xlu0 %v867, 64
      %v875 = vpop.permute.xlu0 %874
      %876 = vrot.lane.b32.xlu0 %v873, 64
      %v877 = vpop.permute.xlu0 %876
      %878 = vrot.lane.b32.xlu0 %v868, 64
      %v879 = vpop.permute.xlu0 %878
      %v880 = vsel %vm863, %v875, %v877
      %v881 = vsel %vm863, %v877, %v879
      %v883 = vsel %vm258, %v870, 0
      %v885 = vsel %vm262, %v880, 0
      %v887 = vsel %vm262, %v881, 0
      %889 = vmatprep.subr.mxu0 %v887
      %890 = vmatpush1.msra.mxu0 %v885
      %891 = vmatprep.subr.mxu0 0.0
      %892 = vmatpush1.msra.mxu0 0.0
      %893 = vmatprep.subr.mxu0 0.0
      %894 = vmatpush1.msra.mxu0 0.0
      %895 = vmatprep.subr.mxu0 0.0
      %896 = vmatpush1.msra.mxu0 0.0
      %897 = vmatprep.subr.mxu0 0.0
      %898 = vmatpush1.msra.mxu0 0.0
      %899 = vmatprep.subr.mxu0 0.0
      %900 = vmatpush1.msra.mxu0 0.0
      %901 = vmatprep.subr.mxu0 0.0
      %902 = vmatpush1.msra.mxu0 0.0
      %903 = vmatprep.subr.mxu0 0.0
      %904 = vmatpush1.msra.mxu0 0.0
      %905 = vmatprep.subr.mxu0 0.0
      %906 = vmatpush1.msra.mxu0 0.0
      %907 = vmatprep.subr.mxu0 0.0
      %908 = vmatpush1.msra.mxu0 0.0
      %909 = vmatprep.subr.mxu0 0.0
      %910 = vmatpush1.msra.mxu0 0.0
      %911 = vmatprep.subr.mxu0 0.0
      %912 = vmatpush1.msra.mxu0 0.0
      %913 = vmatprep.subr.mxu0 0.0
      %914 = vmatpush1.msra.mxu0 0.0
      %915 = vmatprep.subr.mxu0 0.0
      %916 = vmatpush1.msra.mxu0 0.0
      %917 = vmatprep.subr.mxu0 0.0
      %918 = vmatpush1.msra.mxu0 0.0
      %919 = vmatprep.subr.mxu0 0.0
      %920 = vmatpush1.msra.mxu0 0.0
      %921 = vmatprep.subr.mxu0 0.0
      %922 = vmatpush1.msra.mxu0 0.0
      %923 = vmatprep.subr.mxu0 0.0
      %924 = vmatpush1.msra.mxu0 0.0
      %925 = vmatprep.subr.mxu0 0.0
      %926 = vmatpush1.msra.mxu0 0.0
      %927 = vmatprep.subr.mxu0 0.0
      %928 = vmatpush1.msra.mxu0 0.0
      %929 = vmatprep.subr.mxu0 0.0
      %930 = vmatpush1.msra.mxu0 0.0
      %931 = vmatprep.subr.mxu0 0.0
      %932 = vmatpush1.msra.mxu0 0.0
      %933 = vmatprep.subr.mxu0 0.0
      %934 = vmatpush1.msra.mxu0 0.0
      %935 = vmatprep.subr.mxu0 0.0
      %936 = vmatpush1.msra.mxu0 0.0
      %937 = vmatprep.subr.mxu0 0.0
      %938 = vmatpush1.msra.mxu0 0.0
      %939 = vmatprep.subr.mxu0 0.0
      %940 = vmatpush1.msra.mxu0 0.0
      %941 = vmatprep.subr.mxu0 0.0
      %942 = vmatpush1.msra.mxu0 0.0
      %943 = vmatprep.subr.mxu0 0.0
      %944 = vmatpush1.msra.mxu0 0.0
      %945 = vmatprep.subr.mxu0 0.0
      %946 = vmatpush1.msra.mxu0 0.0
      %947 = vmatprep.subr.mxu0 0.0
      %948 = vmatpush1.msra.mxu0 0.0
      %949 = vmatprep.subr.mxu0 0.0
      %950 = vmatpush1.msra.mxu0 0.0
      %951 = vmatprep.subr.mxu0 0.0
      %952 = vmatpush1.msra.mxu0 0.0
      %953 = vmatprep.mubr.f32.mxu0 0.0
      %954 = vmatmul.mubr.f32.gmra.mrb[0].mxu0 %v883
      %v955 = vpop.f32.mrb[0].mxu0
      %v956 = vadd.f32 0.0, %v955
      %v957 = vpop.f32.mrb[0].mxu0
      %v958 = vadd.f32 0.0, %v957
      %959 = vdwg.mxu0
      %v960 = vadd.f32 %v856, %v956
      %v961 = vadd.f32 %v857, %v958
      %v962 = vld [vmem:[%s224] sm:$0xff]
      %v963 = vld [vmem:[%s224 + $0x8] sm:$0xf]
      %s964 = scalar_lea.vmem %s2, 56
      %v965 = vld [vmem:[%s964] sm:$0xff]
      %v968 = vcombine.high %v962, %v962
      %969 = vrot.lane.b32.xlu0 %v962, 62
      %v970 = vpop.permute.xlu0 %969
      %971 = vrot.lane.b32.xlu0 %v968, 62
      %v972 = vpop.permute.xlu0 %971
      %973 = vrot.lane.b32.xlu0 %v963, 62
      %v974 = vpop.permute.xlu0 %973
      %vm975 = vcmask 506880
      %v976 = vsel %vm975, %v970, %v972
      %v977 = vsel %vm975, %v972, %v974
      %v979 = vsel %vm258, %v965, 0
      %v981 = vsel %vm262, %v976, 0
      %v983 = vsel %vm262, %v977, 0
      %985 = vmatprep.subr.mxu0 %v983
      %986 = vmatpush1.msra.mxu0 %v981
      %987 = vmatprep.subr.mxu0 0.0
      %988 = vmatpush1.msra.mxu0 0.0
      %989 = vmatprep.subr.mxu0 0.0
      %990 = vmatpush1.msra.mxu0 0.0
      %991 = vmatprep.subr.mxu0 0.0
      %992 = vmatpush1.msra.mxu0 0.0
      %993 = vmatprep.subr.mxu0 0.0
      %994 = vmatpush1.msra.mxu0 0.0
      %995 = vmatprep.subr.mxu0 0.0
      %996 = vmatpush1.msra.mxu0 0.0
      %997 = vmatprep.subr.mxu0 0.0
      %998 = vmatpush1.msra.mxu0 0.0
      %999 = vmatprep.subr.mxu0 0.0
      %1000 = vmatpush1.msra.mxu0 0.0
      %1001 = vmatprep.subr.mxu0 0.0
      %1002 = vmatpush1.msra.mxu0 0.0
      %1003 = vmatprep.subr.mxu0 0.0
      %1004 = vmatpush1.msra.mxu0 0.0
      %1005 = vmatprep.subr.mxu0 0.0
      %1006 = vmatpush1.msra.mxu0 0.0
      %1007 = vmatprep.subr.mxu0 0.0
      %1008 = vmatpush1.msra.mxu0 0.0
      %1009 = vmatprep.subr.mxu0 0.0
      %1010 = vmatpush1.msra.mxu0 0.0
      %1011 = vmatprep.subr.mxu0 0.0
      %1012 = vmatpush1.msra.mxu0 0.0
      %1013 = vmatprep.subr.mxu0 0.0
      %1014 = vmatpush1.msra.mxu0 0.0
      %1015 = vmatprep.subr.mxu0 0.0
      %1016 = vmatpush1.msra.mxu0 0.0
      %1017 = vmatprep.subr.mxu0 0.0
      %1018 = vmatpush1.msra.mxu0 0.0
      %1019 = vmatprep.subr.mxu0 0.0
      %1020 = vmatpush1.msra.mxu0 0.0
      %1021 = vmatprep.subr.mxu0 0.0
      %1022 = vmatpush1.msra.mxu0 0.0
      %1023 = vmatprep.subr.mxu0 0.0
      %1024 = vmatpush1.msra.mxu0 0.0
      %1025 = vmatprep.subr.mxu0 0.0
      %1026 = vmatpush1.msra.mxu0 0.0
      %1027 = vmatprep.subr.mxu0 0.0
      %1028 = vmatpush1.msra.mxu0 0.0
      %1029 = vmatprep.subr.mxu0 0.0
      %1030 = vmatpush1.msra.mxu0 0.0
      %1031 = vmatprep.subr.mxu0 0.0
      %1032 = vmatpush1.msra.mxu0 0.0
      %1033 = vmatprep.subr.mxu0 0.0
      %1034 = vmatpush1.msra.mxu0 0.0
      %1035 = vmatprep.subr.mxu0 0.0
      %1036 = vmatpush1.msra.mxu0 0.0
      %1037 = vmatprep.subr.mxu0 0.0
      %1038 = vmatpush1.msra.mxu0 0.0
      %1039 = vmatprep.subr.mxu0 0.0
      %1040 = vmatpush1.msra.mxu0 0.0
      %1041 = vmatprep.subr.mxu0 0.0
      %1042 = vmatpush1.msra.mxu0 0.0
      %1043 = vmatprep.subr.mxu0 0.0
      %1044 = vmatpush1.msra.mxu0 0.0
      %1045 = vmatprep.subr.mxu0 0.0
      %1046 = vmatpush1.msra.mxu0 0.0
      %1047 = vmatprep.subr.mxu0 0.0
      %1048 = vmatpush1.msra.mxu0 0.0
      %1049 = vmatprep.mubr.f32.mxu0 0.0
      %1050 = vmatmul.mubr.f32.gmra.mrb[0].mxu0 %v979
      %v1051 = vpop.f32.mrb[0].mxu0
      %v1052 = vadd.f32 0.0, %v1051
      %v1053 = vpop.f32.mrb[0].mxu0
      %v1054 = vadd.f32 0.0, %v1053
      %1055 = vdwg.mxu0
      %v1056 = vadd.f32 %v960, %v1052
      %v1057 = vadd.f32 %v961, %v1054
      %v1058 = vld [vmem:[%s224] sm:$0xff]
      %v1059 = vld [vmem:[%s224 + $0x8] sm:$0xf]
      %1060 = vrot.lane.b32.xlu0 %v449, 68
      %v1061 = vpop.permute.xlu0 %1060
      %v1062 = vrot.slane %v1061, 4
      %vm1063 = vcmask 556032
      %v1064 = vsel %vm1063, %v1062, %v1061
      %v1067 = vmul.f32 %v1058, %v1064
      %v1068 = vmul.f32 %v1059, %v1062
      %s1069 = scalar_lea.vmem %s2, 64
      %v1070 = vld [vmem:[%s1069] sm:$0xff]
      %v1073 = vcombine.high %v1067, %v1067
      %1074 = vrot.lane.b32.xlu0 %v1067, 60
      %v1075 = vpop.permute.xlu0 %1074
      %1076 = vrot.lane.b32.xlu0 %v1073, 60
      %v1077 = vpop.permute.xlu0 %1076
      %1078 = vrot.lane.b32.xlu0 %v1068, 60
      %v1079 = vpop.permute.xlu0 %1078
      %vm1080 = vcmask 490496
      %v1081 = vsel %vm1080, %v1075, %v1077
      %v1082 = vsel %vm1080, %v1077, %v1079
      %v1084 = vsel %vm258, %v1070, 0
      %v1086 = vsel %vm262, %v1081, 0
      %v1088 = vsel %vm262, %v1082, 0
      %1090 = vmatprep.subr.mxu0 %v1088
      %1091 = vmatpush1.msra.mxu0 %v1086
      %1092 = vmatprep.subr.mxu0 0.0
      %1093 = vmatpush1.msra.mxu0 0.0
      %1094 = vmatprep.subr.mxu0 0.0
      %1095 = vmatpush1.msra.mxu0 0.0
      %1096 = vmatprep.subr.mxu0 0.0
      %1097 = vmatpush1.msra.mxu0 0.0
      %1098 = vmatprep.subr.mxu0 0.0
      %1099 = vmatpush1.msra.mxu0 0.0
      %1100 = vmatprep.subr.mxu0 0.0
      %1101 = vmatpush1.msra.mxu0 0.0
      %1102 = vmatprep.subr.mxu0 0.0
      %1103 = vmatpush1.msra.mxu0 0.0
      %1104 = vmatprep.subr.mxu0 0.0
      %1105 = vmatpush1.msra.mxu0 0.0
      %1106 = vmatprep.subr.mxu0 0.0
      %1107 = vmatpush1.msra.mxu0 0.0
      %1108 = vmatprep.subr.mxu0 0.0
      %1109 = vmatpush1.msra.mxu0 0.0
      %1110 = vmatprep.subr.mxu0 0.0
      %1111 = vmatpush1.msra.mxu0 0.0
      %1112 = vmatprep.subr.mxu0 0.0
      %1113 = vmatpush1.msra.mxu0 0.0
      %1114 = vmatprep.subr.mxu0 0.0
      %1115 = vmatpush1.msra.mxu0 0.0
      %1116 = vmatprep.subr.mxu0 0.0
      %1117 = vmatpush1.msra.mxu0 0.0
      %1118 = vmatprep.subr.mxu0 0.0
      %1119 = vmatpush1.msra.mxu0 0.0
      %1120 = vmatprep.subr.mxu0 0.0
      %1121 = vmatpush1.msra.mxu0 0.0
      %1122 = vmatprep.subr.mxu0 0.0
      %1123 = vmatpush1.msra.mxu0 0.0
      %1124 = vmatprep.subr.mxu0 0.0
      %1125 = vmatpush1.msra.mxu0 0.0
      %1126 = vmatprep.subr.mxu0 0.0
      %1127 = vmatpush1.msra.mxu0 0.0
      %1128 = vmatprep.subr.mxu0 0.0
      %1129 = vmatpush1.msra.mxu0 0.0
      %1130 = vmatprep.subr.mxu0 0.0
      %1131 = vmatpush1.msra.mxu0 0.0
      %1132 = vmatprep.subr.mxu0 0.0
      %1133 = vmatpush1.msra.mxu0 0.0
      %1134 = vmatprep.subr.mxu0 0.0
      %1135 = vmatpush1.msra.mxu0 0.0
      %1136 = vmatprep.subr.mxu0 0.0
      %1137 = vmatpush1.msra.mxu0 0.0
      %1138 = vmatprep.subr.mxu0 0.0
      %1139 = vmatpush1.msra.mxu0 0.0
      %1140 = vmatprep.subr.mxu0 0.0
      %1141 = vmatpush1.msra.mxu0 0.0
      %1142 = vmatprep.subr.mxu0 0.0
      %1143 = vmatpush1.msra.mxu0 0.0
      %1144 = vmatprep.subr.mxu0 0.0
      %1145 = vmatpush1.msra.mxu0 0.0
      %1146 = vmatprep.subr.mxu0 0.0
      %1147 = vmatpush1.msra.mxu0 0.0
      %1148 = vmatprep.subr.mxu0 0.0
      %1149 = vmatpush1.msra.mxu0 0.0
      %1150 = vmatprep.subr.mxu0 0.0
      %1151 = vmatpush1.msra.mxu0 0.0
      %1152 = vmatprep.subr.mxu0 0.0
      %1153 = vmatpush1.msra.mxu0 0.0
      %1154 = vmatprep.mubr.f32.mxu0 0.0
      %1155 = vmatmul.mubr.f32.gmra.mrb[0].mxu0 %v1084
      %v1156 = vpop.f32.mrb[0].mxu0
      %v1157 = vadd.f32 0.0, %v1156
      %v1158 = vpop.f32.mrb[0].mxu0
      %v1159 = vadd.f32 0.0, %v1158
      %1160 = vdwg.mxu0
      %v1161 = vadd.f32 %v1056, %v1157
      %v1162 = vadd.f32 %v1057, %v1159
      %v1163 = vmax.f32 %v1161, 0.0
      %v1164 = vmax.f32 %v1162, 0.0
      %v1168 = vrot.slane %v1163, 4
      %v1169 = vrot.slane %v1164, 4
      %1170 = vrot.lane.b32.xlu0 %v1168, 34
      %v1171 = vpop.permute.xlu0 %1170
      %1172 = vrot.lane.b32.xlu0 %v1169, 34
      %v1173 = vpop.permute.xlu0 %1172
      %vm1174 = vcmask 277504
      %v1175 = vsel %vm1174, %v1171, %v1173
      %v1179 = vsel %vm262, %v657, %v1171
      %v1180 = vsel %vm262, %v663, %v1175
      %v1181 = vsel %vm262, %v658, %v1173
      %1185 = vrot.lane.b32.xlu0 %v1179, 94
      %v1186 = vpop.permute.xlu0 %1185
      %1187 = vrot.lane.b32.xlu0 %v1180, 94
      %v1188 = vpop.permute.xlu0 %1187
      %1189 = vrot.lane.b32.xlu0 %v1181, 94
      %v1190 = vpop.permute.xlu0 %1189
      %1191 = vrot.lane.b32.xlu0 %v1171, 94
      %v1192 = vpop.permute.xlu0 %1191
      %1193 = vrot.lane.b32.xlu0 %v1175, 94
      %v1194 = vpop.permute.xlu0 %1193
      %1195 = vrot.lane.b32.xlu0 %v1173, 94
      %v1196 = vpop.permute.xlu0 %1195
      %v1197 = vsel %vm670, %v1186, %v1188
      %v1198 = vsel %vm670, %v1188, %v1190
      %v1199 = vsel %vm670, %v1192, %v1194
      %v1200 = vsel %vm670, %v1194, %v1196
      %1205 = vst [vmem:[%s233] sm:$0xff] %v1197
      %1206 = vst [vmem:[%s233 + $0x8] sm:$0xff] %v1198
      %1207 = vst [vmem:[%s233 + $0x10] sm:$0xf] %v1199
      %1208 = vst [vmem:[%s233 + $0x18] sm:$0xf] %v1200
      %s1209 = smul.u32 2, %s20
      %p1210 = scmp.lt.s32.totalorder %s19, 1
      %s1211 = scalar_select %p1210, %s19, 1
      %p1212 = scmp.lt.s32.totalorder %s1209, 1
      %s1213 = scalar_select %p1212, %s1209, 1
      %s1214 = smul.addr %s1211, 4
      %s1215 = sadd.s32 %s1213, %s1214
      %s1216 = smul.addr %s1215, 8
      %s1217 = scalar_lea.vmem %s4, %s1216
      // Predicated region
      $region37: #{make_dilation_dense_forward.1} parent=35 // pred_check
        %p1218 = pneg %p138
      $region38: #{make_dilation_dense_forward.1} parent=35 // pred_check_branch
        %1220 = sbr.rel (%p1218) target = $region40
      $region39: #{make_dilation_dense_forward.1} parent=35 // pred_region
        %s1221 = smul.u32 2, %s20
      $region40: #{make_dilation_dense_forward.1} parent=35 // pred_fallthru
        _
    $region36: #{make_dilation_dense_forward.1} parent=5 // pred_fallthru
      _
    %p1222 = scmp.le.s32.totalorder 2, %s10
    // Predicated region
    $region41: #{make_dilation_dense_forward.1} parent=5 // pred_check
      %p1223 = pneg %p1222
    $region42: #{make_dilation_dense_forward.1} parent=5 // pred_check_branch
      %1225 = sbr.rel (%p1223) target = $region44
    $region43: #{make_dilation_dense_forward.1} parent=5 // pred_region
      %s1226 = ssub.s32 %s10, 2
      // Predicated region
      $region45: #{make_dilation_dense_forward.1} parent=43 // pred_check
        %p1227 = pneg %p144
      $region46: #{make_dilation_dense_forward.1} parent=43 // pred_check_branch
        %1229 = sbr.rel (%p1227) target = $region48
      $region47: #{make_dilation_dense_forward.1} parent=43 // pred_region
        %s1230 = smul.u32 2, %s22
        %p1231 = scmp.lt.s32.totalorder %s21, 1
        %s1232 = scalar_select %p1231, %s21, 1
        %p1233 = scmp.lt.s32.totalorder %s1230, 1
        %s1234 = scalar_select %p1233, %s1230, 1
        %s1235 = smul.addr %s1232, 4
        %s1236 = sadd.s32 %s1234, %s1235
        %s1237 = smul.addr %s1236, 8
        %s1238 = scalar_lea.vmem %s4, %s1237
      $region48: #{make_dilation_dense_forward.1} parent=43 // pred_fallthru
        _
    $region44: #{make_dilation_dense_forward.1} parent=5 // pred_fallthru
      _
  $region6: #{make_dilation_dense_forward.1} parent=0 // loop_footer
    %s14 = sadd.s32 1, %s10
  $region7: #{make_dilation_dense_forward.1} parent=0 // loop_footer_branch
    %9 = sbr.rel target = $region3
  $region8: #{make_dilation_dense_forward.1} parent=0 // loop_exit
    _

</llo_original>
